<compile_context>
chip_gen: v7x
topology: tpu7x:2x2x1
jax: 0.10.0
libtpu: 0.0.40
codegen_flags: <defaults>
</compile_context>

<pallas_src>
import functools

import jax
import jax.numpy as jnp
from jax import lax
from jax.experimental import pallas as pl
from jax.experimental.pallas import tpu as pltpu


def _round_up(x, m):
    return ((x + m - 1) // m) * m


def _step_vmem_bytes(block_b, H, P):
    """Rough per-grid-step VMEM footprint in bytes (f32)."""
    v_blk = block_b * H * P * 4        # one V block
    pix2 = block_b * P * P * 4         # one (Bt, P, P) temporary
    vec = block_b * max(H, 128) * 4    # one (Bt, H) / (Bt, 128) row slab
    wts = (4 * H * P + 8 * P) * 4      # resident weights + bias / w_h vectors
    # double-buffered V block + broadcast weight copy + ~4 pixel-pixel
    # temporaries (img_t, tanh arg, weighted, reduce) + ht/st/outputs slabs.
    return 3 * v_blk + 4 * pix2 + 10 * vec + 2 * wts


def _pick_block_b(B, H, P, budget_bytes=24 * 1024 * 1024):
    """Largest legal batch tile under the VMEM budget, preferring >=4 grid
    steps (DMA/compute overlap) and >=2 (v7x dual-TensorCore sharding).

    Partial tiles must be multiples of 8 rows so the 2-D (B, H) operands and
    outputs keep (8, 128)-legal blocks; the full batch is always legal.
    """
    cands = sorted({b for b in range(8, B, 8) if B % b == 0} | {B})
    fits = [b for b in cands if _step_vmem_bytes(b, H, P) <= budget_bytes]
    if not fits:
        fits = [cands[0]]
    for min_steps in (4, 2, 1):
        ok = [b for b in fits if B // b >= min_steps]
        if ok:
            return max(ok)
    return fits[0]


def _adaptive_attention_kernel(
    v_ref,       # (Bt, H, P)   native spatial features
    ht_ref,      # (Bt, H)      decoder hidden state
    st_ref,      # (Bt, H)      visual sentinel
    wv_ref,      # (P, H)       W_v_proj.weight
    wgT_ref,     # (H, P)       W_g_proj.weight.T
    wsT_ref,     # (H, P)       W_s_proj.weight.T
    bv_ref,      # (P, 1)       W_v_proj.bias (column: indexed by k / sublane)
    bs_ref,      # (1, P)       W_s_proj.bias (row: indexed by pixel / lane)
    whr_ref,     # (1, P)       w_h.weight (row form)
    whc_ref,     # (P, 1)       w_h.weight (column form)
    # outputs
    cth_ref,     # (Bt, H)      c_t_hat
    ct_ref,      # (Bt, H)      c_t
    ab_ref,      # (Bt, ABW)    [alpha | beta | 0 padding], lane-dense slab
    *,
    compute_dtype,
):
    v = v_ref[...]                                   # (Bt, H, P) f32
    ht = ht_ref[...]                                 # (Bt, H)
    st = st_ref[...]                                 # (Bt, H)
    bt, hdim, npix = v.shape
    abw = ab_ref.shape[1]

    # --- pixel projection in transposed orientation (no (P, P) transpose) ---
    # img_t[b, k, p] = sum_h Wv[k, h] * V[b, h, p]  ==  W_v_proj(V^T)[b, p, k]
    # One batched MXU matmul straight off the native (Bt, H, P) block.
    wv_b = jnp.broadcast_to(wv_ref[...].astype(compute_dtype),
                            (bt, npix, hdim))
    img_t = lax.dot_general(
        wv_b, v.astype(compute_dtype),
        dimension_numbers=(((2,), (1,)), ((0,), (0,))),
        preferred_element_type=jnp.float32)          # (Bt, P_k, P_p)

    # hidden-state / sentinel projections (two small M=Bt MXU dots; the
    # suggested weight-concat fusion needs a different LHS per half).
    ht_proj = jnp.dot(ht, wgT_ref[...],
                      preferred_element_type=jnp.float32)               # (Bt, P)
    st_proj = jnp.dot(st, wsT_ref[...],
                      preferred_element_type=jnp.float32) + bs_ref[...]  # (Bt, P)

    # z[b, p] = sum_k w_h[k] * tanh(img_t[b, k, p] + bv[k] + ht_proj[b, p])
    # ht_proj broadcasts over sublanes (cheap); the weighted reduce is over the
    # sublane (k) axis, so z stays lane-dense in p.
    t = jnp.tanh(img_t + bv_ref[...][None, :, :] + ht_proj[:, None, :])
    z = jnp.sum(t * whc_ref[...][None, :, :], axis=1)                   # (Bt, P)

    # alpha_t = softmax over the pixel (lane) axis.
    m_z = jnp.max(z, axis=-1, keepdims=True)
    e_z = jnp.exp(z - m_z)
    s_z = jnp.sum(e_z, axis=-1, keepdims=True)
    alpha = e_z / s_z                                                    # (Bt, P)

    # sentinel attention score.
    av = jnp.sum(jnp.tanh(st_proj + ht_proj) * whr_ref[...],
                 axis=-1, keepdims=True)                                 # (Bt, 1)

    # beta_t = softmax([z ; av])[-1], reusing m_z / s_z (no second exp over P).
    m_all = jnp.maximum(m_z, av)
    e_av = jnp.exp(av - m_all)
    beta = e_av / (s_z * jnp.exp(m_z - m_all) + e_av)                    # (Bt, 1)

    # c_t[b, h] = sum_p alpha[b, p] * V[b, h, p]  (VPU multiply + lane reduce;
    # no MXU, no block-diagonal trick).
    c_t = jnp.sum(v * alpha[:, None, :], axis=-1)                        # (Bt, H)

    cth_ref[...] = beta * st + (1.0 - beta) * c_t
    ct_ref[...] = c_t

    # Lane-dense packed [alpha | beta | zeros] slab -> one unmasked store.
    parts = [alpha, beta]
    pad = abw - npix - 1
    if pad > 0:
        parts.append(jnp.zeros((bt, pad), jnp.float32))
    ab_ref[...] = jnp.concatenate(parts, axis=-1)


def adaptive_attention(V, ht, st, params, *, block_b=None,
                       compute_dtype=jnp.float32):
    """V: (B, H, P), ht: (B, H), st: (B, H). Returns (c_t_hat, c_t, alpha_t, beta_t)."""
    Wv, bv, Ws, bs, Wg, wh = (params["Wv"], params["bv"], params["Ws"],
                              params["bs"], params["Wg"], params["wh"])
    B, H, P = V.shape

    if block_b is None:
        block_b = _pick_block_b(B, H, P)
    assert B % block_b == 0, "block_b must divide the batch"
    assert block_b == B or block_b % 8 == 0, "partial batch tiles must be 8-aligned"
    nb = B // block_b

    # NOTE: for P not a multiple of 8 (e.g. 49 from a 7x7 feature map), pad the
    # pixel axis of the weights (and V, outside the hot path) to a multiple of
    # 8 and mask the padded logits to -inf before the softmax. The demo P is
    # already aligned, so no padding is performed here.

    # Tiny weight re-shaping only — V itself is passed through untouched.
    wgT = Wg.T                          # (H, P)
    wsT = Ws.T                          # (H, P)
    bv_col = bv.reshape(P, 1)           # added along the k (sublane) axis
    bs_row = bs.reshape(1, P)
    wh_row = wh.reshape(1, P)
    wh_col = wh.reshape(P, 1)

    abw = _round_up(P + 1, 128)         # lane-dense [alpha | beta | pad] slab

    def batch2(cols):
        return pl.BlockSpec((block_b, cols), lambda t: (t, 0))

    def full(shape):
        nd = len(shape)
        return pl.BlockSpec(shape, lambda t, _nd=nd: (0,) * _nd)

    est = _step_vmem_bytes(block_b, H, P)
    vmem_limit = int(min(64 * 1024 * 1024, max(32 * 1024 * 1024, 2 * est)))

    kernel = functools.partial(_adaptive_attention_kernel,
                               compute_dtype=compute_dtype)

    c_t_hat, c_t, ab = pl.pallas_call(
        kernel,
        out_shape=(
            jax.ShapeDtypeStruct((B, H), jnp.float32),     # c_t_hat
            jax.ShapeDtypeStruct((B, H), jnp.float32),     # c_t
            jax.ShapeDtypeStruct((B, abw), jnp.float32),   # [alpha | beta | 0]
        ),
        grid_spec=pltpu.PrefetchScalarGridSpec(
            num_scalar_prefetch=0,
            grid=(nb,),
            in_specs=[
                pl.BlockSpec((block_b, H, P), lambda t: (t, 0, 0)),   # V (native)
                batch2(H),                                            # ht
                batch2(H),                                            # st
                full((P, H)),                                         # Wv
                full((H, P)),                                         # Wg^T
                full((H, P)),                                         # Ws^T
                full((P, 1)),                                         # bv (col)
                full((1, P)),                                         # bs (row)
                full((1, P)),                                         # wh (row)
                full((P, 1)),                                         # wh (col)
            ],
            out_specs=[
                batch2(H),                                            # c_t_hat
                batch2(H),                                            # c_t
                batch2(abw),                                          # alpha|beta
            ],
        ),
        compiler_params=pltpu.CompilerParams(
            dimension_semantics=("parallel",),
            vmem_limit_bytes=vmem_limit),
    )(V, ht, st, Wv, wgT, wsT, bv_col, bs_row, wh_row, wh_col)

    alpha_t = ab[:, :P]
    beta_t = ab[:, P:P + 1]
    return c_t_hat, c_t, alpha_t, beta_t


def adaptive_attention_ref(V, ht, st, params):
    """Pure-JAX reference mirroring the PyTorch forward."""
    Wv, bv, Ws, bs, Wg, wh = (params["Wv"], params["bv"], params["Ws"],
                              params["bs"], params["Wg"], params["wh"])
    Vt = jnp.transpose(V, (0, 2, 1))                            # (B, P, H)
    img_proj = jnp.einsum("bph,kh->bpk", Vt, Wv) + bv           # (B, P, P)
    ht_proj = ht @ Wg.T                                         # (B, P)
    z = jnp.einsum("bpk,k->bp", jnp.tanh(img_proj + ht_proj[:, :, None]), wh[0])
    alpha = jax.nn.softmax(z, axis=1)                           # (B, P)
    c_t = jnp.sum(Vt * alpha[:, :, None], axis=1)               # (B, H)
    av = jnp.einsum("bp,p->b", jnp.tanh(st @ Ws.T + bs + ht_proj), wh[0])[:, None]
    cat = jnp.concatenate([z, av], axis=1)                      # (B, P+1)
    beta = jax.nn.softmax(cat, axis=1)[:, -1:]                  # (B, 1)
    c_t_hat = beta * st + (1 - beta) * c_t
    return c_t_hat, c_t, alpha, beta


if __name__ == "__main__":
    B, H, P = 2, 32, 16  # batch, hidden_dim, n_pixel

    key = jax.random.PRNGKey(0)
    ks = jax.random.split(key, 9)
    params = {
        "Wv": jax.random.normal(ks[0], (P, H), jnp.float32) * 0.1,  # W_v_proj.weight
        "bv": jax.random.normal(ks[1], (P,), jnp.float32) * 0.1,    # W_v_proj.bias
        "Ws": jax.random.normal(ks[2], (P, H), jnp.float32) * 0.1,  # W_s_proj.weight
        "bs": jax.random.normal(ks[3], (P,), jnp.float32) * 0.1,    # W_s_proj.bias
        "Wg": jax.random.normal(ks[4], (P, H), jnp.float32) * 0.1,  # W_g_proj.weight
        "wh": jax.random.normal(ks[5], (1, P), jnp.float32) * 0.1,  # w_h.weight
    }

    V = jax.random.normal(ks[6], (B, H, P), jnp.float32)   # (batch, hidden, n_pixel)
    ht = jax.random.normal(ks[7], (B, H), jnp.float32)
    st = jax.random.normal(ks[8], (B, H), jnp.float32)

    refs = adaptive_attention_ref(V, ht, st, params)
    names = ["c_t_hat", "c_t", "alpha_t", "beta_t"]

    # f32 path (default): tight tolerance against the pure-JAX reference.
    outs = jax.block_until_ready(adaptive_attention(V, ht, st, params))
    for name, o, r in zip(names, outs, refs):
        assert o.shape == r.shape, (name, o.shape, r.shape)
        assert jnp.allclose(o, r, rtol=5e-4, atol=5e-5), (
            name, float(jnp.max(jnp.abs(o - r))))

    # bf16 img-projection path (v6e/v7x suggestion): looser tolerance.
    outs_bf16 = jax.block_until_ready(
        adaptive_attention(V, ht, st, params, compute_dtype=jnp.bfloat16))
    for name, o, r in zip(names, outs_bf16, refs):
        assert o.shape == r.shape, (name, o.shape, r.shape)
        assert jnp.allclose(o, r, rtol=3e-2, atol=3e-3), (
            name, float(jnp.max(jnp.abs(o - r))))

    print("KERNEL_OK")
</pallas_src>

<mosaic_0001>
module attributes {stable_mosaic.version = 11 : i64} {
  func.func @_adaptive_attention_kernel(%arg0: i32, %arg1: memref<2x32x16xf32, #tpu.memory_space<vmem>>, %arg2: memref<2x32xf32, #tpu.memory_space<vmem>>, %arg3: memref<2x32xf32, #tpu.memory_space<vmem>>, %arg4: memref<16x32xf32, #tpu.memory_space<vmem>>, %arg5: memref<32x16xf32, #tpu.memory_space<vmem>>, %arg6: memref<32x16xf32, #tpu.memory_space<vmem>>, %arg7: memref<16x1xf32, #tpu.memory_space<vmem>>, %arg8: memref<1x16xf32, #tpu.memory_space<vmem>>, %arg9: memref<1x16xf32, #tpu.memory_space<vmem>>, %arg10: memref<16x1xf32, #tpu.memory_space<vmem>>, %arg11: memref<2x32xf32, #tpu.memory_space<vmem>>, %arg12: memref<2x32xf32, #tpu.memory_space<vmem>>, %arg13: memref<2x128xf32, #tpu.memory_space<vmem>>) attributes {dimension_semantics = [#tpu.dimension_semantics<parallel>], iteration_bounds = array<i64: 1>, scalar_prefetch = 0 : i64, scratch_operands = 0 : i64, tpu.core_type = #tpu.core_type<tc>, window_params = [{transform_indices = @transform_0, window_bounds = array<i64: 2, 32, 16>}, {transform_indices = @transform_1, window_bounds = array<i64: 2, 32>}, {transform_indices = @transform_2, window_bounds = array<i64: 2, 32>}, {pipeline_mode = #tpu.pipeline_mode<synchronous>, transform_indices = @transform_3, window_bounds = array<i64: 16, 32>}, {pipeline_mode = #tpu.pipeline_mode<synchronous>, transform_indices = @transform_4, window_bounds = array<i64: 32, 16>}, {pipeline_mode = #tpu.pipeline_mode<synchronous>, transform_indices = @transform_5, window_bounds = array<i64: 32, 16>}, {pipeline_mode = #tpu.pipeline_mode<synchronous>, transform_indices = @transform_6, window_bounds = array<i64: 16, 1>}, {pipeline_mode = #tpu.pipeline_mode<synchronous>, transform_indices = @transform_7, window_bounds = array<i64: 1, 16>}, {pipeline_mode = #tpu.pipeline_mode<synchronous>, transform_indices = @transform_8, window_bounds = array<i64: 1, 16>}, {pipeline_mode = #tpu.pipeline_mode<synchronous>, transform_indices = @transform_9, window_bounds = array<i64: 16, 1>}, {transform_indices = @transform_10, window_bounds = array<i64: 2, 32>}, {transform_indices = @transform_11, window_bounds = array<i64: 2, 32>}, {transform_indices = @transform_12, window_bounds = array<i64: 2, 128>}]} {
    %c0 = arith.constant 0 : index
    %c0_0 = arith.constant 0 : index
    %c0_1 = arith.constant 0 : index
    %0 = vector.load %arg1[%c0, %c0_0, %c0_1] : memref<2x32x16xf32, #tpu.memory_space<vmem>>, vector<2x32x16xf32>
    %c0_2 = arith.constant 0 : index
    %c0_3 = arith.constant 0 : index
    %1 = vector.load %arg2[%c0_2, %c0_3] : memref<2x32xf32, #tpu.memory_space<vmem>>, vector<2x32xf32>
    %c0_4 = arith.constant 0 : index
    %c0_5 = arith.constant 0 : index
    %2 = vector.load %arg3[%c0_4, %c0_5] : memref<2x32xf32, #tpu.memory_space<vmem>>, vector<2x32xf32>
    %c0_6 = arith.constant 0 : index
    %c0_7 = arith.constant 0 : index
    %3 = vector.load %arg4[%c0_6, %c0_7] : memref<16x32xf32, #tpu.memory_space<vmem>>, vector<16x32xf32>
    %4 = vector.shape_cast %3 : vector<16x32xf32> to vector<1x16x32xf32>
    %5 = vector.broadcast %4 : vector<1x16x32xf32> to vector<2x16x32xf32>
    %cst = arith.constant dense<0.000000e+00> : vector<2x16x16xf32>
    %6 = tpu.matmul %5, %0, %cst {dimension_numbers = #tpu.dot_dimension_numbers<[2], [1], [1], [2], [0, 0, 0, 1, 1, 2], [0], [0]>} : vector<2x16x32xf32>, vector<2x32x16xf32>, vector<2x16x16xf32> -> vector<2x16x16xf32>
    %c0_8 = arith.constant 0 : index
    %c0_9 = arith.constant 0 : index
    %7 = vector.load %arg5[%c0_8, %c0_9] : memref<32x16xf32, #tpu.memory_space<vmem>>, vector<32x16xf32>
    %cst_10 = arith.constant dense<0.000000e+00> : vector<2x16xf32>
    %8 = tpu.matmul %1, %7, %cst_10 {dimension_numbers = #tpu.dot_dimension_numbers<[1], [0], [0], [1], [0, 0, 1, 1], [], []>} : vector<2x32xf32>, vector<32x16xf32>, vector<2x16xf32> -> vector<2x16xf32>
    %c0_11 = arith.constant 0 : index
    %c0_12 = arith.constant 0 : index
    %9 = vector.load %arg6[%c0_11, %c0_12] : memref<32x16xf32, #tpu.memory_space<vmem>>, vector<32x16xf32>
    %cst_13 = arith.constant dense<0.000000e+00> : vector<2x16xf32>
    %10 = tpu.matmul %2, %9, %cst_13 {dimension_numbers = #tpu.dot_dimension_numbers<[1], [0], [0], [1], [0, 0, 1, 1], [], []>} : vector<2x32xf32>, vector<32x16xf32>, vector<2x16xf32> -> vector<2x16xf32>
    %c0_14 = arith.constant 0 : index
    %c0_15 = arith.constant 0 : index
    %11 = vector.load %arg8[%c0_14, %c0_15] : memref<1x16xf32, #tpu.memory_space<vmem>>, vector<1x16xf32>
    %12 = vector.broadcast %11 : vector<1x16xf32> to vector<2x16xf32>
    %13 = arith.addf %10, %12 : vector<2x16xf32>
    %c0_16 = arith.constant 0 : index
    %c0_17 = arith.constant 0 : index
    %14 = vector.load %arg7[%c0_16, %c0_17] : memref<16x1xf32, #tpu.memory_space<vmem>>, vector<16x1xf32>
    %15 = vector.shape_cast %14 : vector<16x1xf32> to vector<1x16x1xf32>
    %16 = vector.broadcast %15 : vector<1x16x1xf32> to vector<2x16x16xf32>
    %17 = arith.addf %6, %16 : vector<2x16x16xf32>
    %18 = vector.shape_cast %8 : vector<2x16xf32> to vector<2x1x16xf32>
    %19 = vector.broadcast %18 : vector<2x1x16xf32> to vector<2x16x16xf32>
    %20 = arith.addf %17, %19 : vector<2x16x16xf32>
    %21 = math.tanh %20 : vector<2x16x16xf32>
    %c0_18 = arith.constant 0 : index
    %c0_19 = arith.constant 0 : index
    %22 = vector.load %arg10[%c0_18, %c0_19] : memref<16x1xf32, #tpu.memory_space<vmem>>, vector<16x1xf32>
    %23 = vector.shape_cast %22 : vector<16x1xf32> to vector<1x16x1xf32>
    %24 = vector.broadcast %23 : vector<1x16x1xf32> to vector<2x16x16xf32>
    %25 = arith.mulf %21, %24 : vector<2x16x16xf32>
    %cst_20 = arith.constant dense<0.000000e+00> : vector<2x16xf32>
    %26 = vector.multi_reduction <add>, %25, %cst_20 [1] : vector<2x16x16xf32> to vector<2x16xf32>
    %cst_21 = arith.constant dense<0xFF800000> : vector<2xf32>
    %27 = vector.multi_reduction <maximumf>, %26, %cst_21 [1] : vector<2x16xf32> to vector<2xf32>
    %28 = vector.shape_cast %27 : vector<2xf32> to vector<2x1xf32>
    %29 = vector.broadcast %28 : vector<2x1xf32> to vector<2x16xf32>
    %30 = arith.subf %26, %29 : vector<2x16xf32>
    %31 = math.exp %30 : vector<2x16xf32>
    %cst_22 = arith.constant dense<0.000000e+00> : vector<2xf32>
    %32 = vector.multi_reduction <add>, %31, %cst_22 [1] : vector<2x16xf32> to vector<2xf32>
    %33 = vector.shape_cast %32 : vector<2xf32> to vector<2x1xf32>
    %34 = vector.broadcast %33 : vector<2x1xf32> to vector<2x16xf32>
    %35 = arith.divf %31, %34 : vector<2x16xf32>
    %36 = arith.addf %13, %8 : vector<2x16xf32>
    %37 = math.tanh %36 : vector<2x16xf32>
    %c0_23 = arith.constant 0 : index
    %c0_24 = arith.constant 0 : index
    %38 = vector.load %arg9[%c0_23, %c0_24] : memref<1x16xf32, #tpu.memory_space<vmem>>, vector<1x16xf32>
    %39 = vector.broadcast %38 : vector<1x16xf32> to vector<2x16xf32>
    %40 = arith.mulf %37, %39 : vector<2x16xf32>
    %cst_25 = arith.constant dense<0.000000e+00> : vector<2xf32>
    %41 = vector.multi_reduction <add>, %40, %cst_25 [1] : vector<2x16xf32> to vector<2xf32>
    %42 = vector.shape_cast %41 : vector<2xf32> to vector<2x1xf32>
    %43 = arith.maximumf %28, %42 : vector<2x1xf32>
    %44 = arith.subf %42, %43 : vector<2x1xf32>
    %45 = math.exp %44 : vector<2x1xf32>
    %46 = arith.subf %28, %43 : vector<2x1xf32>
    %47 = math.exp %46 : vector<2x1xf32>
    %48 = arith.mulf %33, %47 : vector<2x1xf32>
    %49 = arith.addf %48, %45 : vector<2x1xf32>
    %50 = arith.divf %45, %49 : vector<2x1xf32>
    %51 = vector.shape_cast %35 : vector<2x16xf32> to vector<2x1x16xf32>
    %52 = vector.broadcast %51 : vector<2x1x16xf32> to vector<2x32x16xf32>
    %53 = arith.mulf %0, %52 : vector<2x32x16xf32>
    %cst_26 = arith.constant dense<0.000000e+00> : vector<2x32xf32>
    %54 = vector.multi_reduction <add>, %53, %cst_26 [2] : vector<2x32x16xf32> to vector<2x32xf32>
    %55 = vector.broadcast %50 : vector<2x1xf32> to vector<2x32xf32>
    %56 = arith.mulf %55, %2 : vector<2x32xf32>
    %cst_27 = arith.constant 1.000000e+00 : f32
    %57 = vector.broadcast %cst_27 : f32 to vector<2x1xf32>
    %58 = arith.subf %57, %50 : vector<2x1xf32>
    %59 = vector.broadcast %58 : vector<2x1xf32> to vector<2x32xf32>
    %60 = arith.mulf %59, %54 : vector<2x32xf32>
    %61 = arith.addf %56, %60 : vector<2x32xf32>
    %c0_28 = arith.constant 0 : index
    %c0_29 = arith.constant 0 : index
    %62 = vector.load %arg11[%c0_28, %c0_29] : memref<2x32xf32, #tpu.memory_space<vmem>>, vector<2x32xf32>
    tpu.vector_store %arg11[%c0_28, %c0_29], %61 {strides = array<i32>} : memref<2x32xf32, #tpu.memory_space<vmem>>, vector<2x32xf32>,
    %c0_30 = arith.constant 0 : index
    %c0_31 = arith.constant 0 : index
    %63 = vector.load %arg12[%c0_30, %c0_31] : memref<2x32xf32, #tpu.memory_space<vmem>>, vector<2x32xf32>
    tpu.vector_store %arg12[%c0_30, %c0_31], %54 {strides = array<i32>} : memref<2x32xf32, #tpu.memory_space<vmem>>, vector<2x32xf32>,
    %cst_32 = arith.constant 0.000000e+00 : f32
    %64 = vector.broadcast %cst_32 : f32 to vector<2x111xf32>
    %65 = tpu.concatenate %35, %50, %64 in 1 : vector<2x16xf32>, vector<2x1xf32>, vector<2x111xf32> -> vector<2x128xf32>
    %c0_33 = arith.constant 0 : index
    %c0_34 = arith.constant 0 : index
    %66 = vector.load %arg13[%c0_33, %c0_34] : memref<2x128xf32, #tpu.memory_space<vmem>>, vector<2x128xf32>
    tpu.vector_store %arg13[%c0_33, %c0_34], %65 {strides = array<i32>} : memref<2x128xf32, #tpu.memory_space<vmem>>, vector<2x128xf32>,
    return
  }
  func.func @transform_0(%arg0: i32) -> (i32, i32, i32) {
    %c0_i32 = arith.constant 0 : i32
    %c0_i32_0 = arith.constant 0 : i32
    %c0_i32_1 = arith.constant 0 : i32
    return %arg0, %c0_i32, %c0_i32_0 : i32, i32, i32
  }
  func.func @transform_1(%arg0: i32) -> (i32, i32) {
    %c0_i32 = arith.constant 0 : i32
    %c0_i32_0 = arith.constant 0 : i32
    return %arg0, %c0_i32 : i32, i32
  }
  func.func @transform_2(%arg0: i32) -> (i32, i32) {
    %c0_i32 = arith.constant 0 : i32
    %c0_i32_0 = arith.constant 0 : i32
    return %arg0, %c0_i32 : i32, i32
  }
  func.func @transform_3(%arg0: i32) -> (i32, i32) {
    %c0_i32 = arith.constant 0 : i32
    %c0_i32_0 = arith.constant 0 : i32
    %c0_i32_1 = arith.constant 0 : i32
    return %c0_i32, %c0_i32_0 : i32, i32
  }
  func.func @transform_4(%arg0: i32) -> (i32, i32) {
    %c0_i32 = arith.constant 0 : i32
    %c0_i32_0 = arith.constant 0 : i32
    %c0_i32_1 = arith.constant 0 : i32
    return %c0_i32, %c0_i32_0 : i32, i32
  }
  func.func @transform_5(%arg0: i32) -> (i32, i32) {
    %c0_i32 = arith.constant 0 : i32
    %c0_i32_0 = arith.constant 0 : i32
    %c0_i32_1 = arith.constant 0 : i32
    return %c0_i32, %c0_i32_0 : i32, i32
  }
  func.func @transform_6(%arg0: i32) -> (i32, i32) {
    %c0_i32 = arith.constant 0 : i32
    %c0_i32_0 = arith.constant 0 : i32
    %c0_i32_1 = arith.constant 0 : i32
    return %c0_i32, %c0_i32_0 : i32, i32
  }
  func.func @transform_7(%arg0: i32) -> (i32, i32) {
    %c0_i32 = arith.constant 0 : i32
    %c0_i32_0 = arith.constant 0 : i32
    %c0_i32_1 = arith.constant 0 : i32
    return %c0_i32, %c0_i32_0 : i32, i32
  }
  func.func @transform_8(%arg0: i32) -> (i32, i32) {
    %c0_i32 = arith.constant 0 : i32
    %c0_i32_0 = arith.constant 0 : i32
    %c0_i32_1 = arith.constant 0 : i32
    return %c0_i32, %c0_i32_0 : i32, i32
  }
  func.func @transform_9(%arg0: i32) -> (i32, i32) {
    %c0_i32 = arith.constant 0 : i32
    %c0_i32_0 = arith.constant 0 : i32
    %c0_i32_1 = arith.constant 0 : i32
    return %c0_i32, %c0_i32_0 : i32, i32
  }
  func.func @transform_10(%arg0: i32) -> (i32, i32) {
    %c0_i32 = arith.constant 0 : i32
    %c0_i32_0 = arith.constant 0 : i32
    return %arg0, %c0_i32 : i32, i32
  }
  func.func @transform_11(%arg0: i32) -> (i32, i32) {
    %c0_i32 = arith.constant 0 : i32
    %c0_i32_0 = arith.constant 0 : i32
    return %arg0, %c0_i32 : i32, i32
  }
  func.func @transform_12(%arg0: i32) -> (i32, i32) {
    %c0_i32 = arith.constant 0 : i32
    %c0_i32_0 = arith.constant 0 : i32
    return %arg0, %c0_i32 : i32, i32
  }
}

</mosaic_0001>

<llo_original>
// kernel: tpu_custom_call.1
$region0: #{tpu_custom_call.1}
  #allocation0 [shape = 'u32[]', space=smem, size = 0x4, offset = 0x4, fixed_abs, tag = 'smem constant byte address 0x4 - core index']
  #allocation1 [shape = 'u32[144,128]{1,0:T(1,128)}', space=vmem, size = 0x12000, scoped, tag = 'internal scratch']
  %s0 = inlined_call_operand.vmem [shape: f32[2,32,16], index: 0, kind: input, shape index: {}]
  %s1 = inlined_call_operand.vmem [shape: f32[2,32], index: 1, kind: input, shape index: {}]
  %s2 = inlined_call_operand.vmem [shape: f32[2,32], index: 2, kind: input, shape index: {}]
  %s3 = inlined_call_operand.vmem [shape: f32[16,32], index: 3, kind: input, shape index: {}]
  %s4 = inlined_call_operand.vmem [shape: f32[32,16], index: 4, kind: input, shape index: {}]
  %s5 = inlined_call_operand.vmem [shape: f32[32,16], index: 5, kind: input, shape index: {}]
  %s6 = inlined_call_operand.vmem [shape: f32[16,1], index: 6, kind: input, shape index: {}]
  %s7 = inlined_call_operand.vmem [shape: f32[1,16], index: 7, kind: input, shape index: {}]
  %s8 = inlined_call_operand.vmem [shape: f32[1,16], index: 8, kind: input, shape index: {}]
  %s9 = inlined_call_operand.vmem [shape: f32[16,1], index: 9, kind: input, shape index: {}]
  %s10 = inlined_call_operand.hbm [shape: f32[2,32], index: 10, kind: output, shape index: {0}]
  %s11 = inlined_call_operand.hbm [shape: f32[2,32], index: 11, kind: output, shape index: {1}]
  %s12 = inlined_call_operand.hbm [shape: f32[2,128], index: 12, kind: output, shape index: {2}]
  %13 = xla_tuple %s10, %s11, %s12
  %s14 = sld [smem:[#allocation0]]
  $region66: #{tpu_custom_call.1} parent=0
    _
  %s16 = ssub.s32 1, %s14
  %s17 = scalar_select 0, %s16, %s14
  $region1: #{tpu_custom_call.1} parent=0
    #allocation2 [shape = 'u8[1024]{0}', space=vmem, size = 0x400, scoped, tag = 'output window, operand 0, single buffered']
    #allocation3 [shape = 's32[1]{0}', space=sflag, size = 0x4, scoped, tag = 'scoped memory for tpu_custom_call.1']
    #allocation4 [shape = 'u8[1024]{0}', space=vmem, size = 0x400, scoped, tag = 'output window, operand 1, single buffered']
    #allocation5 [shape = 's32[1]{0}', space=sflag, size = 0x4, scoped, tag = 'scoped memory for tpu_custom_call.1']
    #allocation6 [shape = 'u8[1024]{0}', space=vmem, size = 0x400, scoped, tag = 'output window, operand 2, single buffered']
    %18 = vsyncpa [#allocation3], 0
    %19 = vsyncpa [#allocation5], 0
    // Predicated region
    $region2: #{tpu_custom_call.1} parent=1 // pred_check
      _
    $region3: #{tpu_custom_call.1} parent=1 // pred_check_branch
      %21 = sbr.rel (0) target = $region5
    $region4: #{tpu_custom_call.1} parent=1 // pred_region
      _
    $region5: #{tpu_custom_call.1} parent=1 // pred_fallthru
      _
    // Predicated region
    $region6: #{tpu_custom_call.1} parent=1 // pred_check
      _
    $region7: #{tpu_custom_call.1} parent=1 // pred_check_branch
      %23 = sbr.rel (0) target = $region9
    $region8: #{tpu_custom_call.1} parent=1 // pred_region
      _
    $region9: #{tpu_custom_call.1} parent=1 // pred_fallthru
      _
    // Predicated region
    $region10: #{tpu_custom_call.1} parent=1 // pred_check
      _
    $region11: #{tpu_custom_call.1} parent=1 // pred_check_branch
      %25 = sbr.rel (0) target = $region13
    $region12: #{tpu_custom_call.1} parent=1 // pred_region
      _
    $region13: #{tpu_custom_call.1} parent=1 // pred_fallthru
      _
    // Predicated region
    $region14: #{tpu_custom_call.1} parent=1 // pred_check
      _
    $region15: #{tpu_custom_call.1} parent=1 // pred_check_branch
      %27 = sbr.rel (0) target = $region17
    $region16: #{tpu_custom_call.1} parent=1 // pred_region
      _
    $region17: #{tpu_custom_call.1} parent=1 // pred_fallthru
      _
    // Predicated region
    $region18: #{tpu_custom_call.1} parent=1 // pred_check
      _
    $region19: #{tpu_custom_call.1} parent=1 // pred_check_branch
      %29 = sbr.rel (0) target = $region21
    $region20: #{tpu_custom_call.1} parent=1 // pred_region
      _
    $region21: #{tpu_custom_call.1} parent=1 // pred_fallthru
      _
    // Predicated region
    $region22: #{tpu_custom_call.1} parent=1 // pred_check
      _
    $region23: #{tpu_custom_call.1} parent=1 // pred_check_branch
      %31 = sbr.rel (0) target = $region25
    $region24: #{tpu_custom_call.1} parent=1 // pred_region
      _
    $region25: #{tpu_custom_call.1} parent=1 // pred_fallthru
      _
    // Predicated region
    $region26: #{tpu_custom_call.1} parent=1 // pred_check
      _
    $region27: #{tpu_custom_call.1} parent=1 // pred_check_branch
      %33 = sbr.rel (0) target = $region29
    $region28: #{tpu_custom_call.1} parent=1 // pred_region
      _
    $region29: #{tpu_custom_call.1} parent=1 // pred_fallthru
      _
    // Predicated region
    $region30: #{tpu_custom_call.1} parent=1 // pred_check
      _
    $region31: #{tpu_custom_call.1} parent=1 // pred_check_branch
      %35 = sbr.rel (0) target = $region33
    $region32: #{tpu_custom_call.1} parent=1 // pred_region
      _
    $region33: #{tpu_custom_call.1} parent=1 // pred_fallthru
      _
    // Predicated region
    $region34: #{tpu_custom_call.1} parent=1 // pred_check
      _
    $region35: #{tpu_custom_call.1} parent=1 // pred_check_branch
      %37 = sbr.rel (0) target = $region37
    $region36: #{tpu_custom_call.1} parent=1 // pred_region
      _
    $region37: #{tpu_custom_call.1} parent=1 // pred_fallthru
      _
    // Predicated region
    $region38: #{tpu_custom_call.1} parent=1 // pred_check
      _
    $region39: #{tpu_custom_call.1} parent=1 // pred_check_branch
      %39 = sbr.rel (0) target = $region41
    $region40: #{tpu_custom_call.1} parent=1 // pred_region
      _
    $region41: #{tpu_custom_call.1} parent=1 // pred_fallthru
      _
    %v40 = vld [vmem:[%s0] sm:$0xff]
    %v41 = vld [vmem:[%s0 + $0x8] sm:$0xff]
    %v42 = vld [vmem:[%s0 + $0x10] sm:$0xff]
    %v43 = vld [vmem:[%s0 + $0x18] sm:$0xff]
    %v44 = vld [vmem:[%s0 + $0x20] sm:$0xff]
    %v45 = vld [vmem:[%s0 + $0x28] sm:$0xff]
    %v46 = vld [vmem:[%s0 + $0x30] sm:$0xff]
    %v47 = vld [vmem:[%s0 + $0x38] sm:$0xff]
    %v48 = vld [vmem:[%s1] sm:$0x3]
    %v49 = vld [vmem:[%s2] sm:$0x3]
    %v50 = vld [vmem:[%s3] sm:$0xff]
    %v51 = vld [vmem:[%s3 + $0x8] sm:$0xff]
    %v52 = vld [vmem:[%s4] sm:$0xff]
    %v53 = vld [vmem:[%s4 + $0x8] sm:$0xff]
    %v54 = vld [vmem:[%s4 + $0x10] sm:$0xff]
    %v55 = vld [vmem:[%s4 + $0x18] sm:$0xff]
    %vm56 = vcmask 261120
    %v58 = vsel %vm56, %v48, 0
    %60 = vmatprep.subr.mxu0 0.0
    %61 = vmatpush1.msra.mxu0 %v52
    %62 = vmatprep.subr.mxu0 0.0
    %63 = vmatpush1.msra.mxu0 %v53
    %64 = vmatprep.subr.mxu0 0.0
    %65 = vmatpush1.msra.mxu0 %v54
    %66 = vmatprep.subr.mxu0 0.0
    %67 = vmatpush1.msra.mxu0 %v55
    %68 = vmatprep.subr.mxu0 0.0
    %69 = vmatpush1.msra.mxu0 0.0
    %70 = vmatprep.subr.mxu0 0.0
    %71 = vmatpush1.msra.mxu0 0.0
    %72 = vmatprep.subr.mxu0 0.0
    %73 = vmatpush1.msra.mxu0 0.0
    %74 = vmatprep.subr.mxu0 0.0
    %75 = vmatpush1.msra.mxu0 0.0
    %76 = vmatprep.subr.mxu0 0.0
    %77 = vmatpush1.msra.mxu0 0.0
    %78 = vmatprep.subr.mxu0 0.0
    %79 = vmatpush1.msra.mxu0 0.0
    %80 = vmatprep.subr.mxu0 0.0
    %81 = vmatpush1.msra.mxu0 0.0
    %82 = vmatprep.subr.mxu0 0.0
    %83 = vmatpush1.msra.mxu0 0.0
    %84 = vmatprep.subr.mxu0 0.0
    %85 = vmatpush1.msra.mxu0 0.0
    %86 = vmatprep.subr.mxu0 0.0
    %87 = vmatpush1.msra.mxu0 0.0
    %88 = vmatprep.subr.mxu0 0.0
    %89 = vmatpush1.msra.mxu0 0.0
    %90 = vmatprep.subr.mxu0 0.0
    %91 = vmatpush1.msra.mxu0 0.0
    %92 = vmatprep.subr.mxu0 0.0
    %93 = vmatpush1.msra.mxu0 0.0
    %94 = vmatprep.subr.mxu0 0.0
    %95 = vmatpush1.msra.mxu0 0.0
    %96 = vmatprep.subr.mxu0 0.0
    %97 = vmatpush1.msra.mxu0 0.0
    %98 = vmatprep.subr.mxu0 0.0
    %99 = vmatpush1.msra.mxu0 0.0
    %100 = vmatprep.subr.mxu0 0.0
    %101 = vmatpush1.msra.mxu0 0.0
    %102 = vmatprep.subr.mxu0 0.0
    %103 = vmatpush1.msra.mxu0 0.0
    %104 = vmatprep.subr.mxu0 0.0
    %105 = vmatpush1.msra.mxu0 0.0
    %106 = vmatprep.subr.mxu0 0.0
    %107 = vmatpush1.msra.mxu0 0.0
    %108 = vmatprep.subr.mxu0 0.0
    %109 = vmatpush1.msra.mxu0 0.0
    %110 = vmatprep.subr.mxu0 0.0
    %111 = vmatpush1.msra.mxu0 0.0
    %112 = vmatprep.subr.mxu0 0.0
    %113 = vmatpush1.msra.mxu0 0.0
    %114 = vmatprep.subr.mxu0 0.0
    %115 = vmatpush1.msra.mxu0 0.0
    %116 = vmatprep.subr.mxu0 0.0
    %117 = vmatpush1.msra.mxu0 0.0
    %118 = vmatprep.subr.mxu0 0.0
    %119 = vmatpush1.msra.mxu0 0.0
    %120 = vmatprep.subr.mxu0 0.0
    %121 = vmatpush1.msra.mxu0 0.0
    %122 = vmatprep.subr.mxu0 0.0
    %123 = vmatpush1.msra.mxu0 0.0
    %124 = vmatprep.mubr.f32.mxu0 0.0
    %125 = vmatmul.mubr.f32.gmra.mrb[0].mxu0 %v58
    %v126 = vpop.f32.mrb[0].mxu0
    %v127 = vadd.f32 0.0, %v126
    %v128 = vpop.f32.mrb[0].mxu0
    %129 = vdwg.mxu0
    %v130 = vld [vmem:[%s5] sm:$0xff]
    %v131 = vld [vmem:[%s5 + $0x8] sm:$0xff]
    %v132 = vld [vmem:[%s5 + $0x10] sm:$0xff]
    %v133 = vld [vmem:[%s5 + $0x18] sm:$0xff]
    %v134 = vld [vmem:[%s7] sm:$0x1]
    %v136 = vlaneseq
    %v137 = vshrl.u32 %v136, 7
    %v138 = vsub.s32 0, %v137
    %v139 = vrot.slane %v134, %v138
    %v142 = vsel %vm56, %v49, 0
    %144 = vmatprep.subr.mxu0 0.0
    %145 = vmatpush1.msra.mxu0 %v130
    %146 = vmatprep.subr.mxu0 0.0
    %147 = vmatpush1.msra.mxu0 %v131
    %148 = vmatprep.subr.mxu0 0.0
    %149 = vmatpush1.msra.mxu0 %v132
    %150 = vmatprep.subr.mxu0 0.0
    %151 = vmatpush1.msra.mxu0 %v133
    %152 = vmatprep.subr.mxu0 0.0
    %153 = vmatpush1.msra.mxu0 0.0
    %154 = vmatprep.subr.mxu0 0.0
    %155 = vmatpush1.msra.mxu0 0.0
    %156 = vmatprep.subr.mxu0 0.0
    %157 = vmatpush1.msra.mxu0 0.0
    %158 = vmatprep.subr.mxu0 0.0
    %159 = vmatpush1.msra.mxu0 0.0
    %160 = vmatprep.subr.mxu0 0.0
    %161 = vmatpush1.msra.mxu0 0.0
    %162 = vmatprep.subr.mxu0 0.0
    %163 = vmatpush1.msra.mxu0 0.0
    %164 = vmatprep.subr.mxu0 0.0
    %165 = vmatpush1.msra.mxu0 0.0
    %166 = vmatprep.subr.mxu0 0.0
    %167 = vmatpush1.msra.mxu0 0.0
    %168 = vmatprep.subr.mxu0 0.0
    %169 = vmatpush1.msra.mxu0 0.0
    %170 = vmatprep.subr.mxu0 0.0
    %171 = vmatpush1.msra.mxu0 0.0
    %172 = vmatprep.subr.mxu0 0.0
    %173 = vmatpush1.msra.mxu0 0.0
    %174 = vmatprep.subr.mxu0 0.0
    %175 = vmatpush1.msra.mxu0 0.0
    %176 = vmatprep.subr.mxu0 0.0
    %177 = vmatpush1.msra.mxu0 0.0
    %178 = vmatprep.subr.mxu0 0.0
    %179 = vmatpush1.msra.mxu0 0.0
    %180 = vmatprep.subr.mxu0 0.0
    %181 = vmatpush1.msra.mxu0 0.0
    %182 = vmatprep.subr.mxu0 0.0
    %183 = vmatpush1.msra.mxu0 0.0
    %184 = vmatprep.subr.mxu0 0.0
    %185 = vmatpush1.msra.mxu0 0.0
    %186 = vmatprep.subr.mxu0 0.0
    %187 = vmatpush1.msra.mxu0 0.0
    %188 = vmatprep.subr.mxu0 0.0
    %189 = vmatpush1.msra.mxu0 0.0
    %190 = vmatprep.subr.mxu0 0.0
    %191 = vmatpush1.msra.mxu0 0.0
    %192 = vmatprep.subr.mxu0 0.0
    %193 = vmatpush1.msra.mxu0 0.0
    %194 = vmatprep.subr.mxu0 0.0
    %195 = vmatpush1.msra.mxu0 0.0
    %196 = vmatprep.subr.mxu0 0.0
    %197 = vmatpush1.msra.mxu0 0.0
    %198 = vmatprep.subr.mxu0 0.0
    %199 = vmatpush1.msra.mxu0 0.0
    %200 = vmatprep.subr.mxu0 0.0
    %201 = vmatpush1.msra.mxu0 0.0
    %202 = vmatprep.subr.mxu0 0.0
    %203 = vmatpush1.msra.mxu0 0.0
    %204 = vmatprep.subr.mxu0 0.0
    %205 = vmatpush1.msra.mxu0 0.0
    %206 = vmatprep.subr.mxu0 0.0
    %207 = vmatpush1.msra.mxu0 0.0
    %208 = vmatprep.mubr.f32.mxu0 0.0
    %209 = vmatmul.mubr.f32.gmra.mrb[0].mxu0 %v142
    %v210 = vpop.f32.mrb[0].mxu0
    %v211 = vadd.f32 %v139, %v210
    %v212 = vpop.f32.mrb[0].mxu0
    %213 = vdwg.mxu0
    %v214 = vld [vmem:[%s6] sm:$0xff]
    %v215 = vld [vmem:[%s6 + $0x8] sm:$0xff]
    %217 = vset.pattern.permute.xlu0 0
    %218 = vperm.xlu0 %217, %v214
    %v219 = vpop.permute.xlu0 %218
    %222 = vset.pattern.permute.xlu0 0
    %223 = vperm.xlu0 %222, %v215
    %v224 = vpop.permute.xlu0 %223
    %v227 = vsel %vm56, %v50, 0
    %v230 = vsel %vm56, %v51, 0
    %232 = vmatprep.subr.mxu0 0.0
    %233 = vmatpush1.msra.mxu0 %v40
    %234 = vmatprep.subr.mxu0 0.0
    %235 = vmatpush1.msra.mxu0 %v41
    %236 = vmatprep.subr.mxu0 0.0
    %237 = vmatpush1.msra.mxu0 %v42
    %238 = vmatprep.subr.mxu0 0.0
    %239 = vmatpush1.msra.mxu0 %v43
    %240 = vmatprep.subr.mxu0 0.0
    %241 = vmatpush1.msra.mxu0 0.0
    %242 = vmatprep.subr.mxu0 0.0
    %243 = vmatpush1.msra.mxu0 0.0
    %244 = vmatprep.subr.mxu0 0.0
    %245 = vmatpush1.msra.mxu0 0.0
    %246 = vmatprep.subr.mxu0 0.0
    %247 = vmatpush1.msra.mxu0 0.0
    %248 = vmatprep.subr.mxu0 0.0
    %249 = vmatpush1.msra.mxu0 0.0
    %250 = vmatprep.subr.mxu0 0.0
    %251 = vmatpush1.msra.mxu0 0.0
    %252 = vmatprep.subr.mxu0 0.0
    %253 = vmatpush1.msra.mxu0 0.0
    %254 = vmatprep.subr.mxu0 0.0
    %255 = vmatpush1.msra.mxu0 0.0
    %256 = vmatprep.subr.mxu0 0.0
    %257 = vmatpush1.msra.mxu0 0.0
    %258 = vmatprep.subr.mxu0 0.0
    %259 = vmatpush1.msra.mxu0 0.0
    %260 = vmatprep.subr.mxu0 0.0
    %261 = vmatpush1.msra.mxu0 0.0
    %262 = vmatprep.subr.mxu0 0.0
    %263 = vmatpush1.msra.mxu0 0.0
    %264 = vmatprep.subr.mxu0 0.0
    %265 = vmatpush1.msra.mxu0 0.0
    %266 = vmatprep.subr.mxu0 0.0
    %267 = vmatpush1.msra.mxu0 0.0
    %268 = vmatprep.subr.mxu0 0.0
    %269 = vmatpush1.msra.mxu0 0.0
    %270 = vmatprep.subr.mxu0 0.0
    %271 = vmatpush1.msra.mxu0 0.0
    %272 = vmatprep.subr.mxu0 0.0
    %273 = vmatpush1.msra.mxu0 0.0
    %274 = vmatprep.subr.mxu0 0.0
    %275 = vmatpush1.msra.mxu0 0.0
    %276 = vmatprep.subr.mxu0 0.0
    %277 = vmatpush1.msra.mxu0 0.0
    %278 = vmatprep.subr.mxu0 0.0
    %279 = vmatpush1.msra.mxu0 0.0
    %280 = vmatprep.subr.mxu0 0.0
    %281 = vmatpush1.msra.mxu0 0.0
    %282 = vmatprep.subr.mxu0 0.0
    %283 = vmatpush1.msra.mxu0 0.0
    %284 = vmatprep.subr.mxu0 0.0
    %285 = vmatpush1.msra.mxu0 0.0
    %286 = vmatprep.subr.mxu0 0.0
    %287 = vmatpush1.msra.mxu0 0.0
    %288 = vmatprep.subr.mxu0 0.0
    %289 = vmatpush1.msra.mxu0 0.0
    %290 = vmatprep.subr.mxu0 0.0
    %291 = vmatpush1.msra.mxu0 0.0
    %292 = vmatprep.subr.mxu0 0.0
    %293 = vmatpush1.msra.mxu0 0.0
    %294 = vmatprep.subr.mxu0 0.0
    %295 = vmatpush1.msra.mxu0 0.0
    %296 = vmatprep.mubr.f32.mxu0 0.0
    %297 = vmatmul.mubr.f32.gmra.mrb[0].mxu0 %v227
    %v298 = vpop.f32.mrb[0].mxu0
    %v299 = vadd.f32 %v219, %v298
    %v300 = vpop.f32.mrb[0].mxu0
    %301 = vmatprep.mubr.f32.mxu0 0.0
    %302 = vmatmul.mubr.f32.gmra.mrb[0].mxu0 %v230
    %v303 = vpop.f32.mrb[0].mxu0
    %v304 = vadd.f32 %v224, %v303
    %v305 = vpop.f32.mrb[0].mxu0
    %306 = vdwg.mxu0
    %307 = vmatprep.subr.mxu0 0.0
    %308 = vmatpush1.msra.mxu0 %v44
    %309 = vmatprep.subr.mxu0 0.0
    %310 = vmatpush1.msra.mxu0 %v45
    %311 = vmatprep.subr.mxu0 0.0
    %312 = vmatpush1.msra.mxu0 %v46
    %313 = vmatprep.subr.mxu0 0.0
    %314 = vmatpush1.msra.mxu0 %v47
    %315 = vmatprep.subr.mxu0 0.0
    %316 = vmatpush1.msra.mxu0 0.0
    %317 = vmatprep.subr.mxu0 0.0
    %318 = vmatpush1.msra.mxu0 0.0
    %319 = vmatprep.subr.mxu0 0.0
    %320 = vmatpush1.msra.mxu0 0.0
    %321 = vmatprep.subr.mxu0 0.0
    %322 = vmatpush1.msra.mxu0 0.0
    %323 = vmatprep.subr.mxu0 0.0
    %324 = vmatpush1.msra.mxu0 0.0
    %325 = vmatprep.subr.mxu0 0.0
    %326 = vmatpush1.msra.mxu0 0.0
    %327 = vmatprep.subr.mxu0 0.0
    %328 = vmatpush1.msra.mxu0 0.0
    %329 = vmatprep.subr.mxu0 0.0
    %330 = vmatpush1.msra.mxu0 0.0
    %331 = vmatprep.subr.mxu0 0.0
    %332 = vmatpush1.msra.mxu0 0.0
    %333 = vmatprep.subr.mxu0 0.0
    %334 = vmatpush1.msra.mxu0 0.0
    %335 = vmatprep.subr.mxu0 0.0
    %336 = vmatpush1.msra.mxu0 0.0
    %337 = vmatprep.subr.mxu0 0.0
    %338 = vmatpush1.msra.mxu0 0.0
    %339 = vmatprep.subr.mxu0 0.0
    %340 = vmatpush1.msra.mxu0 0.0
    %341 = vmatprep.subr.mxu0 0.0
    %342 = vmatpush1.msra.mxu0 0.0
    %343 = vmatprep.subr.mxu0 0.0
    %344 = vmatpush1.msra.mxu0 0.0
    %345 = vmatprep.subr.mxu0 0.0
    %346 = vmatpush1.msra.mxu0 0.0
    %347 = vmatprep.subr.mxu0 0.0
    %348 = vmatpush1.msra.mxu0 0.0
    %349 = vmatprep.subr.mxu0 0.0
    %350 = vmatpush1.msra.mxu0 0.0
    %351 = vmatprep.subr.mxu0 0.0
    %352 = vmatpush1.msra.mxu0 0.0
    %353 = vmatprep.subr.mxu0 0.0
    %354 = vmatpush1.msra.mxu0 0.0
    %355 = vmatprep.subr.mxu0 0.0
    %356 = vmatpush1.msra.mxu0 0.0
    %357 = vmatprep.subr.mxu0 0.0
    %358 = vmatpush1.msra.mxu0 0.0
    %359 = vmatprep.subr.mxu0 0.0
    %360 = vmatpush1.msra.mxu0 0.0
    %361 = vmatprep.subr.mxu0 0.0
    %362 = vmatpush1.msra.mxu0 0.0
    %363 = vmatprep.subr.mxu0 0.0
    %364 = vmatpush1.msra.mxu0 0.0
    %365 = vmatprep.subr.mxu0 0.0
    %366 = vmatpush1.msra.mxu0 0.0
    %367 = vmatprep.subr.mxu0 0.0
    %368 = vmatpush1.msra.mxu0 0.0
    %369 = vmatprep.subr.mxu0 0.0
    %370 = vmatpush1.msra.mxu0 0.0
    %371 = vmatprep.mubr.f32.mxu0 0.0
    %372 = vmatmul.mubr.f32.gmra.mrb[0].mxu0 %v227
    %v373 = vpop.f32.mrb[0].mxu0
    %v374 = vadd.f32 %v219, %v373
    %v375 = vpop.f32.mrb[0].mxu0
    %376 = vmatprep.mubr.f32.mxu0 0.0
    %377 = vmatmul.mubr.f32.gmra.mrb[0].mxu0 %v230
    %v378 = vpop.f32.mrb[0].mxu0
    %v379 = vadd.f32 %v224, %v378
    %v380 = vpop.f32.mrb[0].mxu0
    %381 = vdwg.mxu0
    %v384 = vunpack.c.l.s4 1966171168
    %v385 = vunpack.c.0.s8 %v384
    %v386 = vlaneseq
    %v387 = vshrl.u32 %v386, 7
    %v388 = vsub.s32 %v385, %v387
    %v389 = vrot.slane %v127, %v388
    %v390 = vcombine.high %v389, %v389
    %v392 = vunpack.c.l.s4 1966171168
    %v393 = vunpack.c.0.s8 %v392
    %v394 = vlaneseq
    %v395 = vshrl.u32 %v394, 7
    %v396 = vsub.s32 %v393, %v395
    %v397 = vrot.slane %v389, %v396
    %v399 = vunpack.c.l.s4 1966171168
    %v400 = vunpack.c.0.s8 %v399
    %v401 = vlaneseq
    %v402 = vshrl.u32 %v401, 7
    %v403 = vsub.s32 %v400, %v402
    %v404 = vrot.slane %v390, %v403
    %v405 = vlaneseq
    %v406 = vshrl.u32 %v405, 7
    %v407 = vsub.s32 0, %v406
    %v408 = vrot.slane %v397, %v407
    %v409 = vlaneseq
    %v410 = vshrl.u32 %v409, 7
    %v411 = vsub.s32 0, %v410
    %v412 = vrot.slane %v404, %v411
    %v415 = vadd.f32 %v299, %v408
    %v416 = vadd.f32 %v304, %v408
    %v417 = vadd.f32 %v374, %v412
    %v418 = vadd.f32 %v379, %v412
    %v419 = vtanh.pop %v415
    %v420 = vtanh.pop %v416
    %v421 = vtanh.pop %v417
    %v422 = vtanh.pop %v418
    %v423 = vld [vmem:[%s9] sm:$0xff]
    %v424 = vld [vmem:[%s9 + $0x8] sm:$0xff]
    %426 = vset.pattern.permute.xlu0 0
    %427 = vperm.xlu0 %426, %v423
    %v428 = vpop.permute.xlu0 %427
    %431 = vset.pattern.permute.xlu0 0
    %432 = vperm.xlu0 %431, %v424
    %v433 = vpop.permute.xlu0 %432
    %v435 = vmul.f32 %v419, %v428
    %v436 = vmul.f32 %v420, %v433
    %v437 = vmul.f32 %v421, %v428
    %v438 = vmul.f32 %v422, %v433
    %vm439 = vcmask 130048
    %v440 = vsel %vm439, %v435, 0.0
    %v441 = vsel %vm439, %v436, 0.0
    %v442 = vadd.f32 %v440, %v441
    %v443 = vrot.slane %v442, 4
    %v444 = vadd.f32 %v442, %v443
    %v445 = vrot.slane %v444, 2
    %v446 = vadd.f32 %v444, %v445
    %v447 = vrot.slane %v446, 1
    %v448 = vadd.f32 %v446, %v447
    %v449 = vsel %vm439, %v437, 0.0
    %v450 = vsel %vm439, %v438, 0.0
    %v451 = vadd.f32 %v449, %v450
    %v452 = vrot.slane %v451, 4
    %v453 = vadd.f32 %v451, %v452
    %v454 = vrot.slane %v453, 2
    %v455 = vadd.f32 %v453, %v454
    %v456 = vrot.slane %v455, 1
    %v457 = vadd.f32 %v455, %v456
    %vm460 = vcmask 1041409
    %v461 = vsel %vm460, %v457, %v448
    %vm463 = vcmask 123904
    %v464 = vsel %vm463, %v461, -inf
    %465 = vmax.xlane.f32.xlu0 %v464
    %v466 = vpop.xlane.xlu0 %465
    %v468 = vrot.slane %v466, 1
    %v471 = vsub.f32 %v448, %v466
    %v472 = vsub.f32 %v457, %v468
    %v473 = vmul.f32 %v471, 1.442695
    %v474 = vpow.pop %v473
    %v475 = vmul.f32 %v472, 1.442695
    %v476 = vpow.pop %v475
    %v479 = vrot.slane %v476, 7
    %v480 = vsel %vm460, %v479, %v474
    %v482 = vsel %vm463, %v480, 0.0
    %483 = vadd.xlane.f32.xlu0 %v482
    %v484 = vpop.xlane.xlu0 %483
    %v486 = vrot.slane %v484, 1
    %v489 = vrcp.pop %v484
    %v490 = vmul.f32 %v474, %v489
    %v491 = vrcp.pop %v486
    %v492 = vmul.f32 %v476, %v491
    %v493 = vadd.f32 %v211, %v127
    %v494 = vtanh.pop %v493
    %v495 = vld [vmem:[%s8] sm:$0x1]
    %v497 = vlaneseq
    %v498 = vshrl.u32 %v497, 7
    %v499 = vsub.s32 0, %v498
    %v500 = vrot.slane %v495, %v499
    %v502 = vmul.f32 %v494, %v500
    %v503 = vsel %vm463, %v502, 0.0
    %504 = vadd.xlane.f32.xlu0 %v503
    %v505 = vpop.xlane.xlu0 %504
    %v506 = vmax.f32 %v466, %v505
    %v507 = vsub.f32 %v505, %v506
    %v508 = vmul.f32 %v507, 1.442695
    %v509 = vpow.pop %v508
    %v510 = vsub.f32 %v466, %v506
    %v511 = vmul.f32 %v510, 1.442695
    %v512 = vpow.pop %v511
    %v513 = vmul.f32 %v484, %v512
    %v514 = vadd.f32 %v513, %v509
    %v515 = vrcp.pop %v514
    %v516 = vmul.f32 %v509, %v515
    %v517 = vlaneseq
    %v518 = vshrl.u32 %v517, 7
    %v519 = vsub.s32 0, %v518
    %v520 = vrot.slane %v490, %v519
    %v521 = vlaneseq
    %v522 = vshrl.u32 %v521, 7
    %v523 = vsub.s32 0, %v522
    %v524 = vrot.slane %v492, %v523
    %v525 = vmul.f32 %v40, %v520
    %v526 = vmul.f32 %v41, %v520
    %v527 = vmul.f32 %v42, %v520
    %v528 = vmul.f32 %v43, %v520
    %v529 = vmul.f32 %v44, %v524
    %v530 = vmul.f32 %v45, %v524
    %v531 = vmul.f32 %v46, %v524
    %v532 = vmul.f32 %v47, %v524
    %v533 = vsel %vm439, %v525, 0.0
    %534 = vadd.xlane.f32.xlu0 %v533
    %v535 = vpop.xlane.xlu0 %534
    %v536 = vsel %vm439, %v526, 0.0
    %537 = vadd.xlane.f32.xlu0 %v536
    %v538 = vpop.xlane.xlu0 %537
    %v539 = vsel %vm439, %v527, 0.0
    %540 = vadd.xlane.f32.xlu0 %v539
    %v541 = vpop.xlane.xlu0 %540
    %v542 = vsel %vm439, %v528, 0.0
    %543 = vadd.xlane.f32.xlu0 %v542
    %v544 = vpop.xlane.xlu0 %543
    %v545 = vsel %vm439, %v529, 0.0
    %546 = vadd.xlane.f32.xlu0 %v545
    %v547 = vpop.xlane.xlu0 %546
    %v548 = vsel %vm439, %v530, 0.0
    %549 = vadd.xlane.f32.xlu0 %v548
    %v550 = vpop.xlane.xlu0 %549
    %v551 = vsel %vm439, %v531, 0.0
    %552 = vadd.xlane.f32.xlu0 %v551
    %v553 = vpop.xlane.xlu0 %552
    %v554 = vsel %vm439, %v532, 0.0
    %555 = vadd.xlane.f32.xlu0 %v554
    %v556 = vpop.xlane.xlu0 %555
    %v557 = vmul.f32 %v516, %v49
    %v558 = vsub.f32 1.0, %v516
    %v567 = vlaneseq
    %v568 = vand.u32 %v567, 127
    %v569 = vlaneseq
    %v570 = vshrl.u32 %v569, 7
    %v571 = vsub.s32 %v568, %v570
    %v572 = vrot.slane %v535, %v571
    %v573 = vadd.s32 %v568, 4294967288
    %v574 = vlaneseq
    %v575 = vshrl.u32 %v574, 7
    %v576 = vsub.s32 %v573, %v575
    %v577 = vrot.slane %v538, %v576
    %vm578 = vcmask 130112
    %v579 = vsel %vm578, %v577, %v572
    %v580 = vadd.s32 %v568, 4294967280
    %v581 = vlaneseq
    %v582 = vshrl.u32 %v581, 7
    %v583 = vsub.s32 %v580, %v582
    %v584 = vrot.slane %v541, %v583
    %vm585 = vcmask 195712
    %v586 = vsel %vm585, %v584, %v579
    %v587 = vadd.s32 %v568, 4294967272
    %v588 = vlaneseq
    %v589 = vshrl.u32 %v588, 7
    %v590 = vsub.s32 %v587, %v589
    %v591 = vrot.slane %v544, %v590
    %vm592 = vcmask 261312
    %v593 = vsel %vm592, %v591, %v586
    %v594 = vlaneseq
    %v595 = vshrl.u32 %v594, 7
    %v596 = vsub.s32 %v568, %v595
    %v597 = vrot.slane %v547, %v596
    %v598 = vlaneseq
    %v599 = vshrl.u32 %v598, 7
    %v600 = vsub.s32 %v573, %v599
    %v601 = vrot.slane %v550, %v600
    %v602 = vsel %vm578, %v601, %v597
    %v603 = vlaneseq
    %v604 = vshrl.u32 %v603, 7
    %v605 = vsub.s32 %v580, %v604
    %v606 = vrot.slane %v553, %v605
    %v607 = vsel %vm585, %v606, %v602
    %v608 = vlaneseq
    %v609 = vshrl.u32 %v608, 7
    %v610 = vsub.s32 %v587, %v609
    %v611 = vrot.slane %v556, %v610
    %v612 = vsel %vm592, %v611, %v607
    %v613 = vsel %vm460, %v612, %v593
    %v615 = vmul.f32 %v558, %v613
    %v616 = vadd.f32 %v557, %v615
    %vm617 = vcmask 254976
    %618 = vst.msk [vmem:[#allocation2] sm:$0x3] %vm617, %v616
    %619 = vst.msk [vmem:[#allocation4] sm:$0x3] %vm617, %v613
    %v622 = vrot.slane %v492, 7
    %v623 = vsel %vm460, %v622, %v490
    %v625 = vsel %vm439, %v623, %v516
    %vm626 = vcmask 138240
    %v627 = vsel %vm626, %v625, 0.0
    %628 = vst [vmem:[#allocation6] sm:$0x3] %v627
    // Predicated region
    $region42: #{tpu_custom_call.1} parent=1 // pred_check
      _
    $region43: #{tpu_custom_call.1} parent=1 // pred_check_branch
      %630 = sbr.rel (0) target = $region45
    $region44: #{tpu_custom_call.1} parent=1 // pred_region
      %s632 = ssub.s32 32, 32
      %633 = vsyncadd [#allocation3], %s632
      %s635 = sshll.u32 [#allocation2], 4
      %s636 = int_to_ptr.vmem [resolvable:$true] %s635
      %638 = dma.vmem_to_hbm [thread:$0]  %s636, 32, %s10, [#allocation3]
    $region45: #{tpu_custom_call.1} parent=1 // pred_fallthru
      _
    // Predicated region
    $region46: #{tpu_custom_call.1} parent=1 // pred_check
      _
    $region47: #{tpu_custom_call.1} parent=1 // pred_check_branch
      %640 = sbr.rel (0) target = $region49
    $region48: #{tpu_custom_call.1} parent=1 // pred_region
      %s642 = ssub.s32 32, 32
      %643 = vsyncadd [#allocation5], %s642
      %s645 = sshll.u32 [#allocation4], 4
      %s646 = int_to_ptr.vmem [resolvable:$true] %s645
      %648 = dma.vmem_to_hbm [thread:$0]  %s646, 32, %s11, [#allocation5]
    $region49: #{tpu_custom_call.1} parent=1 // pred_fallthru
      _
    // Predicated region
    $region50: #{tpu_custom_call.1} parent=1 // pred_check
      _
    $region51: #{tpu_custom_call.1} parent=1 // pred_check_branch
      %650 = sbr.rel (0) target = $region53
    $region52: #{tpu_custom_call.1} parent=1 // pred_region
      %s652 = ssub.s32 32, 32
      %653 = vsyncadd [#allocation5], %s652
      %s655 = sshll.u32 [#allocation6], 4
      %s656 = int_to_ptr.vmem [resolvable:$true] %s655
      %658 = dma.vmem_to_hbm [thread:$0]  %s656, 32, %s12, [#allocation5]
    $region53: #{tpu_custom_call.1} parent=1 // pred_fallthru
      _
    // Predicated region
    $region54: #{tpu_custom_call.1} parent=1 // pred_check
      _
    $region55: #{tpu_custom_call.1} parent=1 // pred_check_branch
      %660 = sbr.rel (0) target = $region57
    $region56: #{tpu_custom_call.1} parent=1 // pred_region
      %661 = dma.done [#allocation3], 32
    $region57: #{tpu_custom_call.1} parent=1 // pred_fallthru
      _
    // Predicated region
    $region58: #{tpu_custom_call.1} parent=1 // pred_check
      _
    $region59: #{tpu_custom_call.1} parent=1 // pred_check_branch
      %663 = sbr.rel (0) target = $region61
    $region60: #{tpu_custom_call.1} parent=1 // pred_region
      %664 = dma.done [#allocation5], 32
    $region61: #{tpu_custom_call.1} parent=1 // pred_fallthru
      _
    // Predicated region
    $region62: #{tpu_custom_call.1} parent=1 // pred_check
      _
    $region63: #{tpu_custom_call.1} parent=1 // pred_check_branch
      %666 = sbr.rel (0) target = $region65
    $region64: #{tpu_custom_call.1} parent=1 // pred_region
      %667 = dma.done [#allocation5], 32
    $region65: #{tpu_custom_call.1} parent=1 // pred_fallthru
      _
    %668 = vsyncpa [#allocation3], 1
    %669 = vsyncpa [#allocation5], 1

</llo_original>
